<compile_context>
chip_gen: v6e
topology: v6e:2x2x1
jax: 0.10.0
libtpu: 0.0.40
codegen_flags: <defaults>
</compile_context>

<pallas_src>
import functools

import jax
import jax.numpy as jnp
from jax.experimental import pallas as pl
from jax.experimental.pallas import tpu as pltpu


# ---------------------------------------------------------------------------
# Streamed per-(B,C) NCC kernel.
#   grid = (row_blocks, k_blocks); the k (spatial) axis is the reduction axis.
#   Scratch holds 5 running raw moments per row.
# ---------------------------------------------------------------------------
def _ncc_moments_kernel(f_ref, m_ref, o_ref,
                        sf_ref, sm_ref, sff_ref, smm_ref, sfm_ref,
                        *, inv_n):
    k = pl.program_id(1)

    @pl.when(k == 0)
    def _init():
        sf_ref[...] = jnp.zeros_like(sf_ref)
        sm_ref[...] = jnp.zeros_like(sm_ref)
        sff_ref[...] = jnp.zeros_like(sff_ref)
        smm_ref[...] = jnp.zeros_like(smm_ref)
        sfm_ref[...] = jnp.zeros_like(sfm_ref)

    f = f_ref[...].astype(jnp.float32)           # (ROWS, S_TILE)
    m = m_ref[...].astype(jnp.float32)           # (ROWS, S_TILE)

    # Single pass over the tile: raw moments only (no centered temporaries).
    sf_ref[...] += jnp.sum(f, axis=1, keepdims=True)
    sm_ref[...] += jnp.sum(m, axis=1, keepdims=True)
    sff_ref[...] += jnp.sum(f * f, axis=1, keepdims=True)
    smm_ref[...] += jnp.sum(m * m, axis=1, keepdims=True)
    sfm_ref[...] += jnp.sum(f * m, axis=1, keepdims=True)

    @pl.when(k == pl.num_programs(1) - 1)
    def _finalize():
        inv = jnp.float32(inv_n)
        mean_f = sf_ref[...] * inv
        mean_m = sm_ref[...] * inv
        # population variances; clamp tiny negative rounding residue
        var_f = jnp.maximum(sff_ref[...] * inv - mean_f * mean_f, 0.0)
        var_m = jnp.maximum(smm_ref[...] * inv - mean_m * mean_m, 0.0)
        cov = sfm_ref[...] * inv - mean_f * mean_m
        denom = jnp.sqrt(var_f * var_m) + jnp.float32(1e-7)
        # Per-row denom is constant, so cov/denom == torch's divide-then-mean.
        o_ref[...] = cov / denom


def _choose_s_tile(s, rows, elem_bytes, target_bytes=4 << 20):
    """Largest divisor of s that is a multiple of 128 and keeps one input
    block at <= target_bytes."""
    max_lanes = max(128, target_bytes // (rows * elem_bytes))
    best = 128
    t = 128
    while t <= min(s, max_lanes):
        if s % t == 0:
            best = t
        t += 128
    return best


def unmasked_ncc_loss(fixed_patch, moving_patch, predicted_theta, weight,
                      reduction="mean", use_regularization=True):
    """JAX/Pallas equivalent of UnmaskedNCC.forward.

    Returns (1 - ncc + L_reg, 1 - ncc), same as the PyTorch module.
    The sector `mask` computed (and discarded) inside the torch forward has no
    effect on the result, so it is not materialized here.
    """
    B, C, D, H, W = fixed_patch.shape
    S = D * H * W
    BC = B * C
    ROWS = 8
    # TODO(synk): odd spatial sizes / B*C not divisible by 8 would need tail
    # padding + masking of the S tail; not required for this module's usage.
    assert S % 128 == 0, "flattened spatial size must be a multiple of 128"
    assert BC % ROWS == 0, "B*C must be a multiple of 8"

    # Keep native dtype; cast to f32 inside the kernel (halves HBM traffic for
    # bf16 inputs).  reshape of contiguous NCDHW is free.
    f2 = fixed_patch.reshape(BC, S)
    m2 = moving_patch.reshape(BC, S)

    elem_bytes = max(jnp.dtype(f2.dtype).itemsize, jnp.dtype(m2.dtype).itemsize)
    s_tile = _choose_s_tile(S, ROWS, elem_bytes)
    num_k = S // s_tile

    # VMEM budget: 2 inputs x 2 buffers x block + margin, capped for v7x's
    # 64 MiB/TC physical VMEM.
    in_block_bytes = ROWS * s_tile * elem_bytes
    vmem_limit = int(min(48 << 20, max(32 << 20, 4 * in_block_bytes + (8 << 20))))

    kernel = functools.partial(_ncc_moments_kernel, inv_n=1.0 / float(S))

    ncc_rows = pl.pallas_call(
        kernel,
        out_shape=jax.ShapeDtypeStruct((BC, 1), jnp.float32),
        grid=(BC // ROWS, num_k),
        in_specs=[
            pl.BlockSpec((ROWS, s_tile), lambda i, k: (i, k)),
            pl.BlockSpec((ROWS, s_tile), lambda i, k: (i, k)),
        ],
        out_specs=pl.BlockSpec((ROWS, 1), lambda i, k: (i, 0)),
        scratch_shapes=[pltpu.VMEM((ROWS, 1), jnp.float32)] * 5,
        compiler_params=pltpu.CompilerParams(
            dimension_semantics=("parallel", "arbitrary"),
            vmem_limit_bytes=vmem_limit,
        ),
    )(f2, m2)

    ncc = ncc_rows.reshape(B, C)                 # per-(batch, channel) NCC
    if reduction == "mean":
        ncc = jnp.mean(ncc, axis=0)              # shape (C,)
    elif reduction == "sum":
        ncc = jnp.sum(ncc, axis=0)               # shape (C,)
    elif reduction is None or reduction == "none":
        pass                                     # shape (B, C)
    else:
        raise ValueError(f"unknown reduction: {reduction}")

    # --- regularization: weight * (||A - I||_F^2 + ||b||_2^2) --------------
    # Tiny (12*B floats) reduction: plain JAX, no kernel launch.
    w = jnp.float32(weight if use_regularization else 0.0)
    idt_ext = jnp.concatenate(
        [jnp.eye(3, dtype=jnp.float32), jnp.zeros((3, 1), jnp.float32)], axis=1
    )                                            # [I | 0], shape (3, 4)
    resid = predicted_theta.astype(jnp.float32) - idt_ext[None, :, :]   # (B,3,4)
    l_reg = w * jnp.sum(resid * resid)

    return 1.0 - ncc + l_reg, 1.0 - ncc


# ---------------------------------------------------------------------------
# Pure-JAX reference (mirrors the torch code) for a correctness check.
# ---------------------------------------------------------------------------
def _reference(fixed, moving, theta, weight, reduction="mean", use_reg=True):
    f = fixed.astype(jnp.float32)
    m = moving.astype(jnp.float32)
    n = jnp.float32(f.shape[2] * f.shape[3] * f.shape[4])
    fm = jnp.mean(f, axis=(2, 3, 4), keepdims=True)
    mm = jnp.mean(m, axis=(2, 3, 4), keepdims=True)
    fv = jnp.sum((f - fm) ** 2, axis=(2, 3, 4), keepdims=True) / n
    mv = jnp.sum((m - mm) ** 2, axis=(2, 3, 4), keepdims=True) / n
    pixel = (f - fm) * (m - mm) / (jnp.sqrt(fv * mv) + 1e-7)
    ncc = jnp.mean(pixel, axis=(2, 3, 4))
    if reduction == "mean":
        ncc = jnp.mean(ncc, axis=0)
    elif reduction == "sum":
        ncc = jnp.sum(ncc, axis=0)
    w = weight if use_reg else 0.0
    idt = jnp.eye(3, dtype=jnp.float32)
    A = theta[:, :, 0:3].astype(jnp.float32)
    b = theta[:, :, 3].astype(jnp.float32)
    l_reg = w * (jnp.sum((A - idt[None]) ** 2) + jnp.sum(b ** 2))
    return 1.0 - ncc + l_reg, 1.0 - ncc


if __name__ == "__main__":
    key = jax.random.PRNGKey(0)
    k1, k2, k3 = jax.random.split(key, 3)

    B, C, D, H, W = 2, 4, 8, 8, 8
    fixed_patch = jax.random.normal(k1, (B, C, D, H, W), dtype=jnp.float32)
    moving_patch = jax.random.normal(k2, (B, C, D, H, W), dtype=jnp.float32)
    # predicted affine theta [B, 3, 4]: near-identity + small noise
    base = jnp.concatenate(
        [jnp.eye(3, dtype=jnp.float32), jnp.zeros((3, 1), jnp.float32)], axis=1
    )
    predicted_theta = base[None] + 0.05 * jax.random.normal(k3, (B, 3, 4),
                                                            dtype=jnp.float32)
    weight = 0.1

    loss, one_minus_ncc = unmasked_ncc_loss(
        fixed_patch, moving_patch, predicted_theta, weight, reduction="mean",
        use_regularization=True,
    )
    jax.block_until_ready((loss, one_minus_ncc))

    ref_loss, ref_omn = _reference(fixed_patch, moving_patch, predicted_theta,
                                   weight, reduction="mean", use_reg=True)
    assert jnp.allclose(loss, ref_loss, atol=1e-4, rtol=1e-4)
    assert jnp.allclose(one_minus_ncc, ref_omn, atol=1e-4, rtol=1e-4)

    print("KERNEL_OK")
</pallas_src>

<mosaic_0001>
module attributes {stable_mosaic.version = 11 : i64} {
  func.func @_ncc_moments_kernel(%arg0: i32, %arg1: i32, %arg2: memref<8x512xf32, #tpu.memory_space<vmem>>, %arg3: memref<8x512xf32, #tpu.memory_space<vmem>>, %arg4: memref<8x1xf32, #tpu.memory_space<vmem>>, %arg5: memref<8x1xf32, #tpu.memory_space<vmem>>, %arg6: memref<8x1xf32, #tpu.memory_space<vmem>>, %arg7: memref<8x1xf32, #tpu.memory_space<vmem>>, %arg8: memref<8x1xf32, #tpu.memory_space<vmem>>, %arg9: memref<8x1xf32, #tpu.memory_space<vmem>>) attributes {dimension_semantics = [#tpu.dimension_semantics<parallel>, #tpu.dimension_semantics<arbitrary>], iteration_bounds = array<i64: 1, 1>, scalar_prefetch = 0 : i64, scratch_operands = 5 : i64, tpu.core_type = #tpu.core_type<tc>, window_params = [{transform_indices = @transform_0, window_bounds = array<i64: 8, 512>}, {transform_indices = @transform_1, window_bounds = array<i64: 8, 512>}, {transform_indices = @transform_2, window_bounds = array<i64: 8, 1>}]} {
    %c0_i32 = arith.constant 0 : i32
    %0 = arith.cmpi eq, %arg1, %c0_i32 : i32
    %1 = arith.extui %0 : i1 to i32
    %c0_i32_0 = arith.constant 0 : i32
    %2 = arith.cmpi ne, %1, %c0_i32_0 : i32
    scf.if %2 {
      %cst_30 = arith.constant 0.000000e+00 : f32
      %36 = vector.broadcast %cst_30 : f32 to vector<8x1xf32>
      %c0_31 = arith.constant 0 : index
      %c0_32 = arith.constant 0 : index
      %37 = vector.load %arg5[%c0_31, %c0_32] : memref<8x1xf32, #tpu.memory_space<vmem>>, vector<8x1xf32>
      tpu.vector_store %arg5[%c0_31, %c0_32], %36 {strides = array<i32>} : memref<8x1xf32, #tpu.memory_space<vmem>>, vector<8x1xf32>,
      %cst_33 = arith.constant 0.000000e+00 : f32
      %38 = vector.broadcast %cst_33 : f32 to vector<8x1xf32>
      %c0_34 = arith.constant 0 : index
      %c0_35 = arith.constant 0 : index
      %39 = vector.load %arg6[%c0_34, %c0_35] : memref<8x1xf32, #tpu.memory_space<vmem>>, vector<8x1xf32>
      tpu.vector_store %arg6[%c0_34, %c0_35], %38 {strides = array<i32>} : memref<8x1xf32, #tpu.memory_space<vmem>>, vector<8x1xf32>,
      %cst_36 = arith.constant 0.000000e+00 : f32
      %40 = vector.broadcast %cst_36 : f32 to vector<8x1xf32>
      %c0_37 = arith.constant 0 : index
      %c0_38 = arith.constant 0 : index
      %41 = vector.load %arg7[%c0_37, %c0_38] : memref<8x1xf32, #tpu.memory_space<vmem>>, vector<8x1xf32>
      tpu.vector_store %arg7[%c0_37, %c0_38], %40 {strides = array<i32>} : memref<8x1xf32, #tpu.memory_space<vmem>>, vector<8x1xf32>,
      %cst_39 = arith.constant 0.000000e+00 : f32
      %42 = vector.broadcast %cst_39 : f32 to vector<8x1xf32>
      %c0_40 = arith.constant 0 : index
      %c0_41 = arith.constant 0 : index
      %43 = vector.load %arg8[%c0_40, %c0_41] : memref<8x1xf32, #tpu.memory_space<vmem>>, vector<8x1xf32>
      tpu.vector_store %arg8[%c0_40, %c0_41], %42 {strides = array<i32>} : memref<8x1xf32, #tpu.memory_space<vmem>>, vector<8x1xf32>,
      %cst_42 = arith.constant 0.000000e+00 : f32
      %44 = vector.broadcast %cst_42 : f32 to vector<8x1xf32>
      %c0_43 = arith.constant 0 : index
      %c0_44 = arith.constant 0 : index
      %45 = vector.load %arg9[%c0_43, %c0_44] : memref<8x1xf32, #tpu.memory_space<vmem>>, vector<8x1xf32>
      tpu.vector_store %arg9[%c0_43, %c0_44], %44 {strides = array<i32>} : memref<8x1xf32, #tpu.memory_space<vmem>>, vector<8x1xf32>,
    } else {
    }
    %c0 = arith.constant 0 : index
    %c0_1 = arith.constant 0 : index
    %3 = vector.load %arg2[%c0, %c0_1] : memref<8x512xf32, #tpu.memory_space<vmem>>, vector<8x512xf32>
    %c0_2 = arith.constant 0 : index
    %c0_3 = arith.constant 0 : index
    %4 = vector.load %arg3[%c0_2, %c0_3] : memref<8x512xf32, #tpu.memory_space<vmem>>, vector<8x512xf32>
    %c0_4 = arith.constant 0 : index
    %c0_5 = arith.constant 0 : index
    %5 = vector.load %arg5[%c0_4, %c0_5] : memref<8x1xf32, #tpu.memory_space<vmem>>, vector<8x1xf32>
    %cst = arith.constant dense<0.000000e+00> : vector<8xf32>
    %6 = vector.multi_reduction <add>, %3, %cst [1] : vector<8x512xf32> to vector<8xf32>
    %7 = vector.shape_cast %6 : vector<8xf32> to vector<8x1xf32>
    %8 = arith.addf %5, %7 : vector<8x1xf32>
    %c0_6 = arith.constant 0 : index
    %c0_7 = arith.constant 0 : index
    %9 = vector.load %arg5[%c0_6, %c0_7] : memref<8x1xf32, #tpu.memory_space<vmem>>, vector<8x1xf32>
    tpu.vector_store %arg5[%c0_6, %c0_7], %8 {strides = array<i32>} : memref<8x1xf32, #tpu.memory_space<vmem>>, vector<8x1xf32>,
    %c0_8 = arith.constant 0 : index
    %c0_9 = arith.constant 0 : index
    %10 = vector.load %arg6[%c0_8, %c0_9] : memref<8x1xf32, #tpu.memory_space<vmem>>, vector<8x1xf32>
    %cst_10 = arith.constant dense<0.000000e+00> : vector<8xf32>
    %11 = vector.multi_reduction <add>, %4, %cst_10 [1] : vector<8x512xf32> to vector<8xf32>
    %12 = vector.shape_cast %11 : vector<8xf32> to vector<8x1xf32>
    %13 = arith.addf %10, %12 : vector<8x1xf32>
    %c0_11 = arith.constant 0 : index
    %c0_12 = arith.constant 0 : index
    %14 = vector.load %arg6[%c0_11, %c0_12] : memref<8x1xf32, #tpu.memory_space<vmem>>, vector<8x1xf32>
    tpu.vector_store %arg6[%c0_11, %c0_12], %13 {strides = array<i32>} : memref<8x1xf32, #tpu.memory_space<vmem>>, vector<8x1xf32>,
    %c0_13 = arith.constant 0 : index
    %c0_14 = arith.constant 0 : index
    %15 = vector.load %arg7[%c0_13, %c0_14] : memref<8x1xf32, #tpu.memory_space<vmem>>, vector<8x1xf32>
    %16 = arith.mulf %3, %3 : vector<8x512xf32>
    %cst_15 = arith.constant dense<0.000000e+00> : vector<8xf32>
    %17 = vector.multi_reduction <add>, %16, %cst_15 [1] : vector<8x512xf32> to vector<8xf32>
    %18 = vector.shape_cast %17 : vector<8xf32> to vector<8x1xf32>
    %19 = arith.addf %15, %18 : vector<8x1xf32>
    %c0_16 = arith.constant 0 : index
    %c0_17 = arith.constant 0 : index
    %20 = vector.load %arg7[%c0_16, %c0_17] : memref<8x1xf32, #tpu.memory_space<vmem>>, vector<8x1xf32>
    tpu.vector_store %arg7[%c0_16, %c0_17], %19 {strides = array<i32>} : memref<8x1xf32, #tpu.memory_space<vmem>>, vector<8x1xf32>,
    %c0_18 = arith.constant 0 : index
    %c0_19 = arith.constant 0 : index
    %21 = vector.load %arg8[%c0_18, %c0_19] : memref<8x1xf32, #tpu.memory_space<vmem>>, vector<8x1xf32>
    %22 = arith.mulf %4, %4 : vector<8x512xf32>
    %cst_20 = arith.constant dense<0.000000e+00> : vector<8xf32>
    %23 = vector.multi_reduction <add>, %22, %cst_20 [1] : vector<8x512xf32> to vector<8xf32>
    %24 = vector.shape_cast %23 : vector<8xf32> to vector<8x1xf32>
    %25 = arith.addf %21, %24 : vector<8x1xf32>
    %c0_21 = arith.constant 0 : index
    %c0_22 = arith.constant 0 : index
    %26 = vector.load %arg8[%c0_21, %c0_22] : memref<8x1xf32, #tpu.memory_space<vmem>>, vector<8x1xf32>
    tpu.vector_store %arg8[%c0_21, %c0_22], %25 {strides = array<i32>} : memref<8x1xf32, #tpu.memory_space<vmem>>, vector<8x1xf32>,
    %c0_23 = arith.constant 0 : index
    %c0_24 = arith.constant 0 : index
    %27 = vector.load %arg9[%c0_23, %c0_24] : memref<8x1xf32, #tpu.memory_space<vmem>>, vector<8x1xf32>
    %28 = arith.mulf %3, %4 : vector<8x512xf32>
    %cst_25 = arith.constant dense<0.000000e+00> : vector<8xf32>
    %29 = vector.multi_reduction <add>, %28, %cst_25 [1] : vector<8x512xf32> to vector<8xf32>
    %30 = vector.shape_cast %29 : vector<8xf32> to vector<8x1xf32>
    %31 = arith.addf %27, %30 : vector<8x1xf32>
    %c0_26 = arith.constant 0 : index
    %c0_27 = arith.constant 0 : index
    %32 = vector.load %arg9[%c0_26, %c0_27] : memref<8x1xf32, #tpu.memory_space<vmem>>, vector<8x1xf32>
    tpu.vector_store %arg9[%c0_26, %c0_27], %31 {strides = array<i32>} : memref<8x1xf32, #tpu.memory_space<vmem>>, vector<8x1xf32>,
    %c0_i32_28 = arith.constant 0 : i32
    %33 = arith.cmpi eq, %arg1, %c0_i32_28 : i32
    %34 = arith.extui %33 : i1 to i32
    %c0_i32_29 = arith.constant 0 : i32
    %35 = arith.cmpi ne, %34, %c0_i32_29 : i32
    scf.if %35 {
      %c0_30 = arith.constant 0 : index
      %c0_31 = arith.constant 0 : index
      %36 = vector.load %arg5[%c0_30, %c0_31] : memref<8x1xf32, #tpu.memory_space<vmem>>, vector<8x1xf32>
      %cst_32 = arith.constant 0.001953125 : f32
      %37 = vector.broadcast %cst_32 : f32 to vector<8x1xf32>
      %38 = arith.mulf %36, %37 : vector<8x1xf32>
      %c0_33 = arith.constant 0 : index
      %c0_34 = arith.constant 0 : index
      %39 = vector.load %arg6[%c0_33, %c0_34] : memref<8x1xf32, #tpu.memory_space<vmem>>, vector<8x1xf32>
      %cst_35 = arith.constant 0.001953125 : f32
      %40 = vector.broadcast %cst_35 : f32 to vector<8x1xf32>
      %41 = arith.mulf %39, %40 : vector<8x1xf32>
      %c0_36 = arith.constant 0 : index
      %c0_37 = arith.constant 0 : index
      %42 = vector.load %arg7[%c0_36, %c0_37] : memref<8x1xf32, #tpu.memory_space<vmem>>, vector<8x1xf32>
      %cst_38 = arith.constant 0.001953125 : f32
      %43 = vector.broadcast %cst_38 : f32 to vector<8x1xf32>
      %44 = arith.mulf %42, %43 : vector<8x1xf32>
      %45 = arith.mulf %38, %38 : vector<8x1xf32>
      %46 = arith.subf %44, %45 : vector<8x1xf32>
      %cst_39 = arith.constant 0.000000e+00 : f32
      %47 = vector.broadcast %cst_39 : f32 to vector<8x1xf32>
      %48 = arith.maximumf %46, %47 : vector<8x1xf32>
      %c0_40 = arith.constant 0 : index
      %c0_41 = arith.constant 0 : index
      %49 = vector.load %arg8[%c0_40, %c0_41] : memref<8x1xf32, #tpu.memory_space<vmem>>, vector<8x1xf32>
      %cst_42 = arith.constant 0.001953125 : f32
      %50 = vector.broadcast %cst_42 : f32 to vector<8x1xf32>
      %51 = arith.mulf %49, %50 : vector<8x1xf32>
      %52 = arith.mulf %41, %41 : vector<8x1xf32>
      %53 = arith.subf %51, %52 : vector<8x1xf32>
      %cst_43 = arith.constant 0.000000e+00 : f32
      %54 = vector.broadcast %cst_43 : f32 to vector<8x1xf32>
      %55 = arith.maximumf %53, %54 : vector<8x1xf32>
      %c0_44 = arith.constant 0 : index
      %c0_45 = arith.constant 0 : index
      %56 = vector.load %arg9[%c0_44, %c0_45] : memref<8x1xf32, #tpu.memory_space<vmem>>, vector<8x1xf32>
      %cst_46 = arith.constant 0.001953125 : f32
      %57 = vector.broadcast %cst_46 : f32 to vector<8x1xf32>
      %58 = arith.mulf %56, %57 : vector<8x1xf32>
      %59 = arith.mulf %38, %41 : vector<8x1xf32>
      %60 = arith.subf %58, %59 : vector<8x1xf32>
      %61 = arith.mulf %48, %55 : vector<8x1xf32>
      %62 = math.sqrt %61 : vector<8x1xf32>
      %cst_47 = arith.constant 1.000000e-07 : f32
      %63 = vector.broadcast %cst_47 : f32 to vector<8x1xf32>
      %64 = arith.addf %62, %63 : vector<8x1xf32>
      %65 = arith.divf %60, %64 : vector<8x1xf32>
      %c0_48 = arith.constant 0 : index
      %c0_49 = arith.constant 0 : index
      %66 = vector.load %arg4[%c0_48, %c0_49] : memref<8x1xf32, #tpu.memory_space<vmem>>, vector<8x1xf32>
      tpu.vector_store %arg4[%c0_48, %c0_49], %65 {strides = array<i32>} : memref<8x1xf32, #tpu.memory_space<vmem>>, vector<8x1xf32>,
    } else {
    }
    return
  }
  func.func @transform_0(%arg0: i32, %arg1: i32) -> (i32, i32) {
    %c0_i32 = arith.constant 0 : i32
    return %arg0, %arg1 : i32, i32
  }
  func.func @transform_1(%arg0: i32, %arg1: i32) -> (i32, i32) {
    %c0_i32 = arith.constant 0 : i32
    return %arg0, %arg1 : i32, i32
  }
  func.func @transform_2(%arg0: i32, %arg1: i32) -> (i32, i32) {
    %c0_i32 = arith.constant 0 : i32
    %c0_i32_0 = arith.constant 0 : i32
    return %arg0, %c0_i32 : i32, i32
  }
}

</mosaic_0001>

<llo_original>
// kernel: tpu_custom_call.1
$region0: #{tpu_custom_call.1}
  #allocation0 [shape = 'u32[]', space=smem, size = 0x4, offset = 0x4, fixed_abs, tag = 'smem constant byte address 0x4 - core index']
  #allocation1 [shape = 'u32[144,128]{1,0:T(1,128)}', space=vmem, size = 0x12000, scoped, tag = 'internal scratch']
  #allocation2 [shape = 'f32[8,1]{1,0:T(8,128)}', space=vmem, size = 0x1000, scoped, tag = 'scratch operand']
  #allocation3 [shape = 'f32[8,1]{1,0:T(8,128)}', space=vmem, size = 0x1000, scoped, tag = 'scratch operand']
  #allocation4 [shape = 'f32[8,1]{1,0:T(8,128)}', space=vmem, size = 0x1000, scoped, tag = 'scratch operand']
  #allocation5 [shape = 'f32[8,1]{1,0:T(8,128)}', space=vmem, size = 0x1000, scoped, tag = 'scratch operand']
  #allocation6 [shape = 'f32[8,1]{1,0:T(8,128)}', space=vmem, size = 0x1000, scoped, tag = 'scratch operand']
  %s0 = inlined_call_operand.hbm [shape: f32[8,512], index: 0, kind: input, shape index: {}]
  %s1 = inlined_call_operand.hbm [shape: f32[8,512], index: 1, kind: input, shape index: {}]
  %s2 = inlined_call_operand.vmem [shape: f32[8,1], index: 2, kind: output, shape index: {}]
  %s3 = sld [smem:[#allocation0]]
  $region34: #{tpu_custom_call.1} parent=0
    _
  %s5 = ssub.s32 1, %s3
  %s6 = scalar_select 0, %s5, %s3
  $region1: #{tpu_custom_call.1} parent=0
    #allocation7 [shape = 'u8[16384]{0}', space=vmem, size = 0x4000, scoped, tag = 'input window, operand 0, single buffered']
    #allocation8 [shape = 's32[1]{0}', space=sflag, size = 0x4, scoped, tag = 'scoped memory for tpu_custom_call.1']
    #allocation9 [shape = 'u8[16384]{0}', space=vmem, size = 0x4000, scoped, tag = 'input window, operand 1, single buffered']
    #allocation10 [shape = 's32[1]{0}', space=sflag, size = 0x4, scoped, tag = 'scoped memory for tpu_custom_call.1']
    %7 = vsyncpa [#allocation8], 0
    %8 = vsyncpa [#allocation10], 0
    // Predicated region
    $region2: #{tpu_custom_call.1} parent=1 // pred_check
      _
    $region3: #{tpu_custom_call.1} parent=1 // pred_check_branch
      %10 = sbr.rel (0) target = $region5
    $region4: #{tpu_custom_call.1} parent=1 // pred_region
      %s12 = ssub.s32 512, 512
      %13 = vsyncadd [#allocation8], %s12
      %s15 = sshll.u32 [#allocation7], 4
      %s16 = int_to_ptr.vmem [resolvable:$true] %s15
      %18 = dma.hbm_to_vmem [thread:$0]  %s0, 512, %s16, [#allocation8]
    $region5: #{tpu_custom_call.1} parent=1 // pred_fallthru
      _
    // Predicated region
    $region6: #{tpu_custom_call.1} parent=1 // pred_check
      _
    $region7: #{tpu_custom_call.1} parent=1 // pred_check_branch
      %20 = sbr.rel (0) target = $region9
    $region8: #{tpu_custom_call.1} parent=1 // pred_region
      %s22 = ssub.s32 512, 512
      %23 = vsyncadd [#allocation10], %s22
      %s25 = sshll.u32 [#allocation9], 4
      %s26 = int_to_ptr.vmem [resolvable:$true] %s25
      %28 = dma.hbm_to_vmem [thread:$0]  %s1, 512, %s26, [#allocation10]
    $region9: #{tpu_custom_call.1} parent=1 // pred_fallthru
      _
    // Predicated region
    $region10: #{tpu_custom_call.1} parent=1 // pred_check
      _
    $region11: #{tpu_custom_call.1} parent=1 // pred_check_branch
      %30 = sbr.rel (0) target = $region13
    $region12: #{tpu_custom_call.1} parent=1 // pred_region
      %31 = dma.done [#allocation8], 512
    $region13: #{tpu_custom_call.1} parent=1 // pred_fallthru
      _
    // Predicated region
    $region14: #{tpu_custom_call.1} parent=1 // pred_check
      _
    $region15: #{tpu_custom_call.1} parent=1 // pred_check_branch
      %33 = sbr.rel (0) target = $region17
    $region16: #{tpu_custom_call.1} parent=1 // pred_region
      %34 = dma.done [#allocation10], 512
    $region17: #{tpu_custom_call.1} parent=1 // pred_fallthru
      _
    %p35 = scmp.eq.s32.totalorder 0, 0
    // Predicated region
    $region18: #{tpu_custom_call.1} parent=1 // pred_check
      %p36 = pneg %p35
    $region19: #{tpu_custom_call.1} parent=1 // pred_check_branch
      %38 = sbr.rel (%p36) target = $region21
    $region20: #{tpu_custom_call.1} parent=1 // pred_region
      %vm39 = vcmask 7168
      %40 = vst.msk [vmem:[#allocation2] sm:$0xff] %vm39, 0.0
      %41 = vst.msk [vmem:[#allocation3] sm:$0xff] %vm39, 0.0
      %42 = vst.msk [vmem:[#allocation4] sm:$0xff] %vm39, 0.0
      %43 = vst.msk [vmem:[#allocation5] sm:$0xff] %vm39, 0.0
      %44 = vst.msk [vmem:[#allocation6] sm:$0xff] %vm39, 0.0
    $region21: #{tpu_custom_call.1} parent=1 // pred_fallthru
      _
    %v45 = vld [vmem:[#allocation7] sm:$0xff]
    %v46 = vld [vmem:[#allocation7 + $0x8] sm:$0xff]
    %v47 = vld [vmem:[#allocation7 + $0x10] sm:$0xff]
    %v48 = vld [vmem:[#allocation7 + $0x18] sm:$0xff]
    %v49 = vld [vmem:[#allocation9] sm:$0xff]
    %v50 = vld [vmem:[#allocation9 + $0x8] sm:$0xff]
    %v51 = vld [vmem:[#allocation9 + $0x10] sm:$0xff]
    %v52 = vld [vmem:[#allocation9 + $0x18] sm:$0xff]
    %v53 = vld [vmem:[#allocation2] sm:$0xff]
    %v54 = vadd.f32 %v45, %v46
    %v55 = vadd.f32 %v54, %v47
    %v56 = vadd.f32 %v55, %v48
    %57 = vadd.xlane.f32.xlu0 %v56
    %v58 = vpop.xlane.xlu0 %57
    %v59 = vadd.f32 %v53, %v58
    %vm60 = vcmask 7168
    %61 = vst.msk [vmem:[#allocation2] sm:$0xff] %vm60, %v59
    %v62 = vld [vmem:[#allocation3] sm:$0xff]
    %v63 = vadd.f32 %v49, %v50
    %v64 = vadd.f32 %v63, %v51
    %v65 = vadd.f32 %v64, %v52
    %66 = vadd.xlane.f32.xlu0 %v65
    %v67 = vpop.xlane.xlu0 %66
    %v68 = vadd.f32 %v62, %v67
    %69 = vst.msk [vmem:[#allocation3] sm:$0xff] %vm60, %v68
    %v70 = vld [vmem:[#allocation4] sm:$0xff]
    %v71 = vmul.f32 %v45, %v45
    %v72 = vmul.f32 %v46, %v46
    %v73 = vmul.f32 %v47, %v47
    %v74 = vmul.f32 %v48, %v48
    %v75 = vadd.f32 %v71, %v72
    %v76 = vadd.f32 %v75, %v73
    %v77 = vadd.f32 %v76, %v74
    %78 = vadd.xlane.f32.xlu0 %v77
    %v79 = vpop.xlane.xlu0 %78
    %v80 = vadd.f32 %v70, %v79
    %81 = vst.msk [vmem:[#allocation4] sm:$0xff] %vm60, %v80
    %v82 = vld [vmem:[#allocation5] sm:$0xff]
    %v83 = vmul.f32 %v49, %v49
    %v84 = vmul.f32 %v50, %v50
    %v85 = vmul.f32 %v51, %v51
    %v86 = vmul.f32 %v52, %v52
    %v87 = vadd.f32 %v83, %v84
    %v88 = vadd.f32 %v87, %v85
    %v89 = vadd.f32 %v88, %v86
    %90 = vadd.xlane.f32.xlu0 %v89
    %v91 = vpop.xlane.xlu0 %90
    %v92 = vadd.f32 %v82, %v91
    %93 = vst.msk [vmem:[#allocation5] sm:$0xff] %vm60, %v92
    %v94 = vld [vmem:[#allocation6] sm:$0xff]
    %v95 = vmul.f32 %v45, %v49
    %v96 = vmul.f32 %v46, %v50
    %v97 = vmul.f32 %v47, %v51
    %v98 = vmul.f32 %v48, %v52
    %v99 = vadd.f32 %v95, %v96
    %v100 = vadd.f32 %v99, %v97
    %v101 = vadd.f32 %v100, %v98
    %102 = vadd.xlane.f32.xlu0 %v101
    %v103 = vpop.xlane.xlu0 %102
    %v104 = vadd.f32 %v94, %v103
    %105 = vst.msk [vmem:[#allocation6] sm:$0xff] %vm60, %v104
    // Predicated region
    $region22: #{tpu_custom_call.1} parent=1 // pred_check
      %p106 = pneg %p35
    $region23: #{tpu_custom_call.1} parent=1 // pred_check_branch
      %108 = sbr.rel (%p106) target = $region25
    $region24: #{tpu_custom_call.1} parent=1 // pred_region
      %v109 = vld [vmem:[#allocation2] sm:$0xff]
      %v110 = vmul.f32 %v109, 0.001953125
      %v111 = vld [vmem:[#allocation3] sm:$0xff]
      %v112 = vmul.f32 %v111, 0.001953125
      %v113 = vld [vmem:[#allocation4] sm:$0xff]
      %v114 = vmul.f32 %v113, 0.001953125
      %v115 = vmul.f32 %v110, %v110
      %v116 = vsub.f32 %v114, %v115
      %v117 = vmax.f32 %v116, 0.0
      %v118 = vld [vmem:[#allocation5] sm:$0xff]
      %v119 = vmul.f32 %v118, 0.001953125
      %v120 = vmul.f32 %v112, %v112
      %v121 = vsub.f32 %v119, %v120
      %v122 = vmax.f32 %v121, 0.0
      %v123 = vld [vmem:[#allocation6] sm:$0xff]
      %v124 = vmul.f32 %v123, 0.001953125
      %v125 = vmul.f32 %v110, %v112
      %v126 = vsub.f32 %v124, %v125
      %v127 = vmul.f32 %v117, %v122
      %v128 = vrsqrt.pop %v127
      %v129 = vmul.f32 %v127, %v128
      %vm130 = vcmp.eq.f32.partialorder %v127, inf
      %v131 = vsel %vm130, %v127, %v129
      %vm132 = vcmp.eq.f32.partialorder %v127, 0.0
      %v133 = vand.u32 %v127, 2147483648
      %v134 = vsel %vm132, %v133, %v131
      %v135 = vadd.f32 %v134, 1e-07
      %v136 = vrcp.pop %v135
      %v137 = vmul.f32 %v126, %v136
      %138 = vst.msk [vmem:[%s2] sm:$0xff] %vm60, %v137
    $region25: #{tpu_custom_call.1} parent=1 // pred_fallthru
      _
    // Predicated region
    $region26: #{tpu_custom_call.1} parent=1 // pred_check
      _
    $region27: #{tpu_custom_call.1} parent=1 // pred_check_branch
      %140 = sbr.rel (0) target = $region29
    $region28: #{tpu_custom_call.1} parent=1 // pred_region
      _
    $region29: #{tpu_custom_call.1} parent=1 // pred_fallthru
      _
    // Predicated region
    $region30: #{tpu_custom_call.1} parent=1 // pred_check
      _
    $region31: #{tpu_custom_call.1} parent=1 // pred_check_branch
      %142 = sbr.rel (0) target = $region33
    $region32: #{tpu_custom_call.1} parent=1 // pred_region
      _
    $region33: #{tpu_custom_call.1} parent=1 // pred_fallthru
      _
    %143 = vsyncpa [#allocation8], 1
    %144 = vsyncpa [#allocation10], 1

</llo_original>
